<compile_context>
chip_gen: v5e
topology: v5e:2x2
jax: 0.10.0
libtpu: 0.0.40
codegen_flags: <defaults>
</compile_context>

<pallas_src>
import functools

import jax
import jax.numpy as jnp
from jax.experimental import pallas as pl
from jax.experimental.pallas import tpu as pltpu


def _round_up(v, m):
    return ((v + m - 1) // m) * m


def _round_down(v, m):
    return (v // m) * m


def _largest_divisor_leq(n, cap):
    cap = max(1, min(int(n), int(cap)))
    for d in range(cap, 0, -1):
        if n % d == 0:
            return d
    return 1


def _channel_attention_kernel(x_ref, w1t_ref, w2t_ref, o_ref, acc_ref,
                              *, hw, hw_tile, b_tile):
    # x_ref:   (b_tile, C, hw_tile)  input dtype (f32 or bf16)
    # w1t_ref: (C, Cr)  f32   Conv2d(C -> Cr, 1x1, bias=False) weight, transposed
    # w2t_ref: (Cr, C)  f32   Conv2d(Cr -> C, 1x1, bias=False) weight, transposed
    # o_ref:   (b_tile, 1, C) f32   sigmoid channel-attention per batch element
    # acc_ref: (2*b_tile, C)  f32   rows [0:b_tile) = running sum,
    #                               rows [b_tile:2*b_tile) = running max
    t = pl.program_id(1)
    num_t = pl.num_programs(1)
    C = acc_ref.shape[-1]

    @pl.when(t == 0)
    def _init():
        acc_ref[0:b_tile, :] = jnp.zeros((b_tile, C), jnp.float32)
        acc_ref[b_tile:2 * b_tile, :] = jnp.full((b_tile, C), -jnp.inf, jnp.float32)

    def _accumulate(x_sum, x_max):
        acc_ref[0:b_tile, :] += jnp.sum(x_sum, axis=-1)
        acc_ref[b_tile:2 * b_tile, :] = jnp.maximum(
            acc_ref[b_tile:2 * b_tile, :], jnp.max(x_max, axis=-1))

    has_tail = (hw % hw_tile) != 0

    if has_tail:
        # Steady state: plain sum/max accumulate, no masking work.
        @pl.when(t < num_t - 1)
        def _steady():
            x = x_ref[...].astype(jnp.float32)
            _accumulate(x, x)

        # Final tile only: mask the overrunning lanes (0 for sum, -inf for max).
        @pl.when(t == num_t - 1)
        def _tail():
            x = x_ref[...].astype(jnp.float32)
            lane = jax.lax.broadcasted_iota(jnp.int32, x.shape, dimension=2)
            valid = (t * hw_tile + lane) < hw
            _accumulate(jnp.where(valid, x, 0.0), jnp.where(valid, x, -jnp.inf))
    else:
        x = x_ref[...].astype(jnp.float32)
        _accumulate(x, x)

    @pl.when(t == num_t - 1)
    def _finalize():
        # sums -> means with a single scale in the epilogue.
        acc_ref[0:b_tile, :] *= jnp.float32(1.0 / hw)
        pooled = acc_ref[...]                                # (2*b_tile, C)

        # Fused shared MLP: one dot with W1^T for both pooled vectors, ReLU,
        # then sum the avg/max halves (linearity of the 2nd conv under 'add')
        # and a single dot with W2^T.
        h = jnp.maximum(
            jnp.dot(pooled, w1t_ref[...], preferred_element_type=jnp.float32),
            0.0)                                             # (2*b_tile, Cr)
        h_sum = h[0:b_tile, :] + h[b_tile:2 * b_tile, :]     # (b_tile, Cr)
        combined = jnp.dot(h_sum, w2t_ref[...],
                           preferred_element_type=jnp.float32)   # (b_tile, C)

        # sigmoid; reciprocal on the otherwise-idle EUP slot (approx).
        att = pl.reciprocal(1.0 + jnp.exp(-combined), approx=True)
        o_ref[...] = att.reshape(b_tile, 1, C).astype(o_ref.dtype)


def channel_attention_add(x, w1, w2, *, hw_tile=None, batch_tile=None):
    """
    x:  (N, C, H, W)  f32 or bf16 (NCHW, like the PyTorch module)
    w1: (Cr, C)  f32  weight of Conv2d(C -> Cr, 1x1, bias=False), squeezed
    w2: (C, Cr)  f32  weight of Conv2d(Cr -> C, 1x1, bias=False), squeezed
    returns channel attention map of shape (N, C, 1, 1) float32
    """
    N, C, H, W = x.shape
    Cr = w1.shape[0]
    HW = H * W

    x_flat = x.reshape(N, C, HW)                 # native dtype (bf16 stays bf16)
    w1t = jnp.asarray(w1, jnp.float32).T         # (C, Cr)
    w2t = jnp.asarray(w2, jnp.float32).T         # (Cr, C)
    itemsize = x_flat.dtype.itemsize

    # ---- generation-aware VMEM limit -------------------------------------
    vmem_limit = 32 << 20                        # safe on every generation
    try:
        info = pltpu.get_tpu_info()
        cap = getattr(info, "vmem_capacity_bytes", None)
        if cap and cap > (32 << 20):
            # ~48 MiB on v7x (64 MiB physical), 96 MiB on v5e/v6e (128 MiB).
            vmem_limit = min(int(cap) * 3 // 4, 96 << 20)
    except Exception:
        pass

    # ---- byte-targeted tiling --------------------------------------------
    # Per-step block target of several MiB (>> ~0.35us fixed per-step cost),
    # capped so double-buffered blocks + in-kernel f32 temporaries fit VMEM.
    max_block_bytes = min(8 << 20, vmem_limit // 8)
    col_bytes = max(1, C * itemsize)             # bytes per HW lane column

    hw_pad = _round_up(HW, 128)
    if hw_tile is None:
        hw_tile = max(128, _round_down(max_block_bytes // col_bytes, 128))
    else:
        hw_tile = max(128, _round_up(int(hw_tile), 128))
    hw_tile = min(hw_tile, hw_pad)
    if hw_tile >= HW:
        hw_tile = HW          # full-extent block: exact, no tail masking needed
    num_hw_tiles = int(pl.cdiv(HW, hw_tile))

    step_bytes = C * hw_tile * itemsize
    if batch_tile is not None:
        b_tile = _largest_divisor_leq(N, batch_tile)
    elif num_hw_tiles == 1 and N > 1 and step_bytes < max_block_bytes:
        want = max(1, max_block_bytes // max(1, step_bytes))
        cap_megacore = max(1, N // 2)   # keep >= 2 batch blocks for the 2 TCs
        b_tile = _largest_divisor_leq(N, min(want, cap_megacore))
    else:
        b_tile = 1

    kernel = functools.partial(_channel_attention_kernel,
                               hw=HW, hw_tile=hw_tile, b_tile=b_tile)

    out = pl.pallas_call(
        kernel,
        out_shape=jax.ShapeDtypeStruct((N, 1, C), jnp.float32),
        grid=(N // b_tile, num_hw_tiles),
        in_specs=[
            pl.BlockSpec((b_tile, C, hw_tile), lambda b, t: (b, 0, t)),
            pl.BlockSpec((C, Cr), lambda b, t: (0, 0)),
            pl.BlockSpec((Cr, C), lambda b, t: (0, 0)),
        ],
        out_specs=pl.BlockSpec((b_tile, 1, C), lambda b, t: (b, 0, 0)),
        scratch_shapes=[
            pltpu.VMEM((2 * b_tile, C), jnp.float32),   # [sums; maxes]
        ],
        compiler_params=pltpu.CompilerParams(
            dimension_semantics=("parallel", "arbitrary"),
            vmem_limit_bytes=int(vmem_limit),
        ),
    )(x_flat, w1t, w2t)

    return out.reshape(N, C, 1, 1)


def channel_attention_ref(x, w1, w2):
    """Pure-JAX reference mirroring the PyTorch forward (combination='add')."""
    xf = x.astype(jnp.float32)
    avg_pool = jnp.mean(xf, axis=(2, 3))                       # (N, C)
    max_pool = jnp.max(xf, axis=(2, 3))                        # (N, C)

    def mlp(v):
        h = jnp.maximum(v @ jnp.asarray(w1, jnp.float32).T, 0.0)   # (N, Cr)
        return h @ jnp.asarray(w2, jnp.float32).T                   # (N, C)

    combined = mlp(avg_pool) + mlp(max_pool)
    return jax.nn.sigmoid(combined)[:, :, None, None]


if __name__ == "__main__":
    key = jax.random.PRNGKey(0)
    kx, k1, k2, kx2, kx3 = jax.random.split(key, 5)

    # Module config: gate_channels=32, reduction_ratio=16 -> reduced_channels=2
    N, C, H, W = 2, 32, 16, 16
    reduction_ratio = 16
    Cr = max(1, C // reduction_ratio)

    # Deterministic synthetic weights for the two 1x1 convs (no bias).
    w1 = jax.random.normal(k1, (Cr, C), dtype=jnp.float32) * (1.0 / jnp.sqrt(C))
    w2 = jax.random.normal(k2, (C, Cr), dtype=jnp.float32) * (1.0 / jnp.sqrt(Cr))

    # Tolerances are set for the approximate EUP reciprocal in the sigmoid.
    TOL_F32 = dict(atol=5e-3, rtol=5e-3)
    TOL_BF16 = dict(atol=2e-2, rtol=2e-2)

    # Test 1: f32, default byte-targeted tiling (single full-HW tile here).
    x = jax.random.normal(kx, (N, C, H, W), dtype=jnp.float32)
    out = jax.block_until_ready(channel_attention_add(x, w1, w2))
    ref = channel_attention_ref(x, w1, w2)
    assert out.shape == (N, C, 1, 1)
    assert jnp.allclose(out, ref, **TOL_F32)

    # Test 2: forced small hw_tile -> pipelined multi-tile HW reduction.
    out1b = jax.block_until_ready(channel_attention_add(x, w1, w2, hw_tile=128))
    assert jnp.allclose(out1b, ref, **TOL_F32)

    # Test 3: HW not a multiple of the tile -> masked final tile only.
    H2, W2 = 13, 13
    x2 = jax.random.normal(kx2, (N, C, H2, W2), dtype=jnp.float32)
    out2 = jax.block_until_ready(channel_attention_add(x2, w1, w2, hw_tile=128))
    ref2 = channel_attention_ref(x2, w1, w2)
    assert jnp.allclose(out2, ref2, **TOL_F32)

    # Test 4: many small batch elements -> batch-tiled blocks (B_TILE > 1).
    N3, H3, W3 = 8, 4, 4
    x3 = jax.random.normal(kx3, (N3, C, H3, W3), dtype=jnp.float32)
    out3 = jax.block_until_ready(channel_attention_add(x3, w1, w2))
    ref3 = channel_attention_ref(x3, w1, w2)
    assert out3.shape == (N3, C, 1, 1)
    assert jnp.allclose(out3, ref3, **TOL_F32)

    # Test 5: bf16 input streamed at half the HBM bytes, f32 accumulation.
    xb = x.astype(jnp.bfloat16)
    out4 = jax.block_until_ready(channel_attention_add(xb, w1, w2, hw_tile=128))
    ref4 = channel_attention_ref(xb, w1, w2)
    assert jnp.allclose(out4, ref4, **TOL_BF16)

    print("KERNEL_OK")
</pallas_src>

<mosaic_0001>
module attributes {stable_mosaic.version = 11 : i64} {
  func.func @_channel_attention_kernel(%arg0: i32, %arg1: i32, %arg2: memref<1x32x256xf32, #tpu.memory_space<vmem>>, %arg3: memref<32x2xf32, #tpu.memory_space<vmem>>, %arg4: memref<2x32xf32, #tpu.memory_space<vmem>>, %arg5: memref<1x1x32xf32, #tpu.memory_space<vmem>>, %arg6: memref<2x32xf32, #tpu.memory_space<vmem>>) attributes {dimension_semantics = [#tpu.dimension_semantics<parallel>, #tpu.dimension_semantics<arbitrary>], iteration_bounds = array<i64: 2, 1>, scalar_prefetch = 0 : i64, scratch_operands = 1 : i64, tpu.core_type = #tpu.core_type<tc>, window_params = [{transform_indices = @transform_0, window_bounds = array<i64: 1, 32, 256>}, {pipeline_mode = #tpu.pipeline_mode<synchronous>, transform_indices = @transform_1, window_bounds = array<i64: 32, 2>}, {pipeline_mode = #tpu.pipeline_mode<synchronous>, transform_indices = @transform_2, window_bounds = array<i64: 2, 32>}, {transform_indices = @transform_3, window_bounds = array<i64: 1, 1, 32>}]} {
    %c0_i32 = arith.constant 0 : i32
    %0 = arith.cmpi eq, %arg1, %c0_i32 : i32
    %1 = arith.extui %0 : i1 to i32
    %c0_i32_0 = arith.constant 0 : i32
    %2 = arith.cmpi ne, %1, %c0_i32_0 : i32
    scf.if %2 {
      %cst_13 = arith.constant 0.000000e+00 : f32
      %15 = vector.broadcast %cst_13 : f32 to vector<1x32xf32>
      %c0_14 = arith.constant 0 : index
      %c0_15 = arith.constant 0 : index
      %16 = vector.load %arg6[%c0_14, %c0_15] : memref<2x32xf32, #tpu.memory_space<vmem>>, vector<1x32xf32>
      tpu.vector_store %arg6[%c0_14, %c0_15], %15 {strides = array<i32>} : memref<2x32xf32, #tpu.memory_space<vmem>>, vector<1x32xf32>,
      %cst_16 = arith.constant 0xFF800000 : f32
      %17 = vector.broadcast %cst_16 : f32 to vector<1x32xf32>
      %c1_17 = arith.constant 1 : index
      %c0_18 = arith.constant 0 : index
      %18 = vector.load %arg6[%c1_17, %c0_18] : memref<2x32xf32, #tpu.memory_space<vmem>>, vector<1x32xf32>
      tpu.vector_store %arg6[%c1_17, %c0_18], %17 {strides = array<i32>} : memref<2x32xf32, #tpu.memory_space<vmem>>, vector<1x32xf32>,
    } else {
    }
    %c0 = arith.constant 0 : index
    %c0_1 = arith.constant 0 : index
    %c0_2 = arith.constant 0 : index
    %3 = vector.load %arg2[%c0, %c0_1, %c0_2] : memref<1x32x256xf32, #tpu.memory_space<vmem>>, vector<1x32x256xf32>
    %c0_3 = arith.constant 0 : index
    %c0_4 = arith.constant 0 : index
    %4 = vector.load %arg6[%c0_3, %c0_4] : memref<2x32xf32, #tpu.memory_space<vmem>>, vector<1x32xf32>
    %cst = arith.constant dense<0.000000e+00> : vector<1x32xf32>
    %5 = vector.multi_reduction <add>, %3, %cst [2] : vector<1x32x256xf32> to vector<1x32xf32>
    %6 = arith.addf %4, %5 : vector<1x32xf32>
    %c0_5 = arith.constant 0 : index
    %c0_6 = arith.constant 0 : index
    %7 = vector.load %arg6[%c0_5, %c0_6] : memref<2x32xf32, #tpu.memory_space<vmem>>, vector<1x32xf32>
    tpu.vector_store %arg6[%c0_5, %c0_6], %6 {strides = array<i32>} : memref<2x32xf32, #tpu.memory_space<vmem>>, vector<1x32xf32>,
    %c1 = arith.constant 1 : index
    %c0_7 = arith.constant 0 : index
    %8 = vector.load %arg6[%c1, %c0_7] : memref<2x32xf32, #tpu.memory_space<vmem>>, vector<1x32xf32>
    %cst_8 = arith.constant dense<0xFF800000> : vector<1x32xf32>
    %9 = vector.multi_reduction <maximumf>, %3, %cst_8 [2] : vector<1x32x256xf32> to vector<1x32xf32>
    %10 = arith.maximumf %8, %9 : vector<1x32xf32>
    %c1_9 = arith.constant 1 : index
    %c0_10 = arith.constant 0 : index
    %11 = vector.load %arg6[%c1_9, %c0_10] : memref<2x32xf32, #tpu.memory_space<vmem>>, vector<1x32xf32>
    tpu.vector_store %arg6[%c1_9, %c0_10], %10 {strides = array<i32>} : memref<2x32xf32, #tpu.memory_space<vmem>>, vector<1x32xf32>,
    %c0_i32_11 = arith.constant 0 : i32
    %12 = arith.cmpi eq, %arg1, %c0_i32_11 : i32
    %13 = arith.extui %12 : i1 to i32
    %c0_i32_12 = arith.constant 0 : i32
    %14 = arith.cmpi ne, %13, %c0_i32_12 : i32
    scf.if %14 {
      %c0_13 = arith.constant 0 : index
      %c0_14 = arith.constant 0 : index
      %15 = vector.load %arg6[%c0_13, %c0_14] : memref<2x32xf32, #tpu.memory_space<vmem>>, vector<1x32xf32>
      %cst_15 = arith.constant 3.906250e-03 : f32
      %16 = vector.broadcast %cst_15 : f32 to vector<1x32xf32>
      %17 = arith.mulf %15, %16 : vector<1x32xf32>
      %c0_16 = arith.constant 0 : index
      %c0_17 = arith.constant 0 : index
      %18 = vector.load %arg6[%c0_16, %c0_17] : memref<2x32xf32, #tpu.memory_space<vmem>>, vector<1x32xf32>
      tpu.vector_store %arg6[%c0_16, %c0_17], %17 {strides = array<i32>} : memref<2x32xf32, #tpu.memory_space<vmem>>, vector<1x32xf32>,
      %c0_18 = arith.constant 0 : index
      %c0_19 = arith.constant 0 : index
      %19 = vector.load %arg6[%c0_18, %c0_19] : memref<2x32xf32, #tpu.memory_space<vmem>>, vector<2x32xf32>
      %c0_20 = arith.constant 0 : index
      %c0_21 = arith.constant 0 : index
      %20 = vector.load %arg3[%c0_20, %c0_21] : memref<32x2xf32, #tpu.memory_space<vmem>>, vector<32x2xf32>
      %cst_22 = arith.constant dense<0.000000e+00> : vector<2x2xf32>
      %21 = tpu.matmul %19, %20, %cst_22 {dimension_numbers = #tpu.dot_dimension_numbers<[1], [0], [0], [1], [0, 0, 1, 1], [], []>} : vector<2x32xf32>, vector<32x2xf32>, vector<2x2xf32> -> vector<2x2xf32>
      %cst_23 = arith.constant 0.000000e+00 : f32
      %22 = vector.broadcast %cst_23 : f32 to vector<2x2xf32>
      %23 = arith.maximumf %21, %22 : vector<2x2xf32>
      %24 = vector.extract_strided_slice %23 {offsets = [0, 0], sizes = [1, 2], strides = [1, 1]} : vector<2x2xf32> to vector<1x2xf32>
      %25 = vector.extract_strided_slice %23 {offsets = [1, 0], sizes = [1, 2], strides = [1, 1]} : vector<2x2xf32> to vector<1x2xf32>
      %26 = arith.addf %24, %25 : vector<1x2xf32>
      %c0_24 = arith.constant 0 : index
      %c0_25 = arith.constant 0 : index
      %27 = vector.load %arg4[%c0_24, %c0_25] : memref<2x32xf32, #tpu.memory_space<vmem>>, vector<2x32xf32>
      %cst_26 = arith.constant dense<0.000000e+00> : vector<1x32xf32>
      %28 = tpu.matmul %26, %27, %cst_26 {dimension_numbers = #tpu.dot_dimension_numbers<[1], [0], [0], [1], [0, 0, 1, 1], [], []>} : vector<1x2xf32>, vector<2x32xf32>, vector<1x32xf32> -> vector<1x32xf32>
      %cst_27 = arith.constant 0.000000e+00 : f32
      %29 = vector.broadcast %cst_27 : f32 to vector<1x32xf32>
      %30 = arith.subf %29, %28 : vector<1x32xf32>
      %31 = math.exp %30 : vector<1x32xf32>
      %cst_28 = arith.constant 1.000000e+00 : f32
      %32 = vector.broadcast %cst_28 : f32 to vector<1x32xf32>
      %33 = arith.addf %32, %31 : vector<1x32xf32>
      %34 = tpu.reciprocal %33 {approx = true} : vector<1x32xf32> -> vector<1x32xf32>
      %35 = vector.shape_cast %34 : vector<1x32xf32> to vector<1x1x32xf32>
      %c0_29 = arith.constant 0 : index
      %c0_30 = arith.constant 0 : index
      %c0_31 = arith.constant 0 : index
      %36 = vector.load %arg5[%c0_29, %c0_30, %c0_31] : memref<1x1x32xf32, #tpu.memory_space<vmem>>, vector<1x1x32xf32>
      tpu.vector_store %arg5[%c0_29, %c0_30, %c0_31], %35 {strides = array<i32>} : memref<1x1x32xf32, #tpu.memory_space<vmem>>, vector<1x1x32xf32>,
    } else {
    }
    return
  }
  func.func @transform_0(%arg0: i32, %arg1: i32) -> (i32, i32, i32) {
    %c0_i32 = arith.constant 0 : i32
    %c0_i32_0 = arith.constant 0 : i32
    return %arg0, %c0_i32, %arg1 : i32, i32, i32
  }
  func.func @transform_1(%arg0: i32, %arg1: i32) -> (i32, i32) {
    %c0_i32 = arith.constant 0 : i32
    %c0_i32_0 = arith.constant 0 : i32
    %c0_i32_1 = arith.constant 0 : i32
    return %c0_i32, %c0_i32_0 : i32, i32
  }
  func.func @transform_2(%arg0: i32, %arg1: i32) -> (i32, i32) {
    %c0_i32 = arith.constant 0 : i32
    %c0_i32_0 = arith.constant 0 : i32
    %c0_i32_1 = arith.constant 0 : i32
    return %c0_i32, %c0_i32_0 : i32, i32
  }
  func.func @transform_3(%arg0: i32, %arg1: i32) -> (i32, i32, i32) {
    %c0_i32 = arith.constant 0 : i32
    %c0_i32_0 = arith.constant 0 : i32
    %c0_i32_1 = arith.constant 0 : i32
    return %arg0, %c0_i32, %c0_i32_0 : i32, i32, i32
  }
}

</mosaic_0001>

<llo_original>
// kernel: tpu_custom_call.1
$region0: #{tpu_custom_call.1}
  #allocation0 [shape = 'u32[]', space=smem, size = 0x4, offset = 0x4, fixed_abs, tag = 'smem constant byte address 0x4 - core index']
  #allocation1 [shape = 'u32[72,128]{1,0:T(1,128)}', space=vmem, size = 0x9000, scoped, tag = 'internal scratch']
  #allocation2 [shape = 'f32[2,32]{1,0:T(2,128)}', space=vmem, size = 0x400, scoped, tag = 'scratch operand']
  %s0 = inlined_call_operand.hbm [shape: f32[2,32,256], index: 0, kind: input, shape index: {}]
  %s1 = inlined_call_operand.vmem [shape: f32[32,2], index: 1, kind: input, shape index: {}]
  %s2 = inlined_call_operand.vmem [shape: f32[2,32], index: 2, kind: input, shape index: {}]
  %s3 = inlined_call_operand.hbm [shape: f32[2,1,32], index: 3, kind: output, shape index: {}]
  %s4 = sld [smem:[#allocation0]]
  $region57: #{tpu_custom_call.1} parent=0
    _
  %s6 = ssub.s32 1, %s4
  %s7 = scalar_select 0, %s6, %s4
  $region1: #{tpu_custom_call.1} parent=0
    #allocation3 [shape = 'u8[65536]{0}', space=vmem, size = 0x10000, scoped, tag = 'input window, operand 0']
    #allocation4 [shape = 's32[2]{0}', space=sflag, size = 0x8, scoped, tag = 'scoped memory for tpu_custom_call.1']
    #allocation5 [shape = 's32[2]{0}', space=sflag, size = 0x8, scoped, tag = 'scoped memory for tpu_custom_call.1']
    #allocation6 [shape = 'u8[1024]{0}', space=vmem, size = 0x400, scoped, tag = 'output window, operand 0']
    %8 = vsyncpa [#allocation4], 0
    %s9 = scalar_lea.sflag [#allocation4], 1
    %10 = vsyncpa %s9, 0
    %11 = vsyncpa [#allocation5], 0
    %s12 = scalar_lea.sflag [#allocation5], 1
    %13 = vsyncpa %s12, 0
    loop: start=0, step=1, limit=4
    $region2: #{tpu_custom_call.1} parent=1 // loop_pre_header
      _
    $region3: #{tpu_custom_call.1} parent=1 // loop_header
      %s15 = sphi 0, %s19
      %p16 = scmp.ge.s32.totalorder %s15, 4
      %s22 = sphi 0, %s34
      %s23 = sphi 0, %s30
      %s24 = sphi 0, %s22
      %s25 = sphi 0, %s23
      %s26 = sphi 0, %s24
      %s27 = sphi 0, %s25
      %s39 = sphi 0, %s41
      %s42 = sphi 0, %s39
      %s43 = sphi 0, %s42
      %s59 = sphi 0, %s43
      %s63 = sphi 0, %s63
      %s65 = sphi 0, %s63
      %s66 = sphi 0, %s65
      %s80 = sphi 0, %s66
      %s84 = sphi 0, %s84
      %s86 = sphi 0, %s84
      %s87 = sphi 0, %s86
      %s101 = sphi 0, %s87
      %s107 = sphi 0, %s109
      %s110 = sphi 0, %s107
      %s111 = sphi 0, %s110
      %s127 = sphi 0, %s111
    $region4: #{tpu_custom_call.1} parent=1 // loop_header_branch
      %18 = sbr.rel (%p16) target = $region8
    $region5: #{tpu_custom_call.1} parent=1 // loop_body
      %s20 = ssub.s32 %s15, 1
      %s21 = ssub.s32 %s15, 2
      %s28 = sadd.s32 1, %s23
      %p29 = scmp.ge.s32.totalorder %s28, 1
      %s30 = scalar_select %p29, 0, %s28
      %s31 = sadd.s32 1, %s22
      %s32 = scalar_select %p29, %s31, %s22
      %p33 = scmp.ge.s32.totalorder %s32, 2
      %s34 = scalar_select %p33, 0, %s32
      %s35 = ssub.s32 %s22, %s34
      %s36 = ssub.s32 %s23, %s30
      %s37 = sor.u32 %s35, %s36
      %p38 = scmp.eq.s32.totalorder %s37, 0
      %s40 = sadd.s32 %s39, 1
      %s41 = scalar_select %p38, %s39, %s40
      %p44 = pneg %p38
      %p45 = scmp.eq.s32.totalorder %s15, 1
      %p46 = por %p44, %p45
      %p47 = scmp.ne.s32.totalorder %s39, %s42
      %p48 = scmp.eq.s32.totalorder %s15, 0
      %p49 = por %p47, %p48
      %p50 = scmp.ne.s32.totalorder %s39, %s42
      %p51 = scmp.eq.s32.totalorder %s20, 1
      %p52 = por %p50, %p51
      %p53 = scmp.ne.s32.totalorder %s42, %s43
      %p54 = scmp.eq.s32.totalorder %s20, 0
      %p55 = por %p53, %p54
      %p56 = scmp.ne.s32.totalorder %s42, %s43
      %p57 = scmp.eq.s32.totalorder %s21, 1
      %p58 = por %p56, %p57
      %p60 = scmp.ne.s32.totalorder %s43, %s59
      %p61 = scmp.eq.s32.totalorder %s21, 0
      %p62 = por %p60, %p61
      %s64 = sadd.s32 %s63, 1
      %p67 = scmp.eq.s32.totalorder %s15, 1
      %p68 = scmp.ne.s32.totalorder %s63, %s65
      %p69 = scmp.eq.s32.totalorder %s15, 0
      %p70 = por %p68, %p69
      %p71 = scmp.ne.s32.totalorder %s63, %s65
      %p72 = scmp.eq.s32.totalorder %s20, 1
      %p73 = por %p71, %p72
      %p74 = scmp.ne.s32.totalorder %s65, %s66
      %p75 = scmp.eq.s32.totalorder %s20, 0
      %p76 = por %p74, %p75
      %p77 = scmp.ne.s32.totalorder %s65, %s66
      %p78 = scmp.eq.s32.totalorder %s21, 1
      %p79 = por %p77, %p78
      %p81 = scmp.ne.s32.totalorder %s66, %s80
      %p82 = scmp.eq.s32.totalorder %s21, 0
      %p83 = por %p81, %p82
      %s85 = sadd.s32 %s84, 1
      %p88 = scmp.eq.s32.totalorder %s15, 1
      %p89 = scmp.ne.s32.totalorder %s84, %s86
      %p90 = scmp.eq.s32.totalorder %s15, 0
      %p91 = por %p89, %p90
      %p92 = scmp.ne.s32.totalorder %s84, %s86
      %p93 = scmp.eq.s32.totalorder %s20, 1
      %p94 = por %p92, %p93
      %p95 = scmp.ne.s32.totalorder %s86, %s87
      %p96 = scmp.eq.s32.totalorder %s20, 0
      %p97 = por %p95, %p96
      %p98 = scmp.ne.s32.totalorder %s86, %s87
      %p99 = scmp.eq.s32.totalorder %s21, 1
      %p100 = por %p98, %p99
      %p102 = scmp.ne.s32.totalorder %s87, %s101
      %p103 = scmp.eq.s32.totalorder %s21, 0
      %p104 = por %p102, %p103
      %s105 = ssub.s32 %s22, %s34
      %p106 = scmp.eq.s32.totalorder %s105, 0
      %s108 = sadd.s32 %s107, 1
      %s109 = scalar_select %p106, %s107, %s108
      %p112 = pneg %p106
      %p113 = scmp.eq.s32.totalorder %s15, 1
      %p114 = por %p112, %p113
      %p115 = scmp.ne.s32.totalorder %s107, %s110
      %p116 = scmp.eq.s32.totalorder %s15, 0
      %p117 = por %p115, %p116
      %p118 = scmp.ne.s32.totalorder %s107, %s110
      %p119 = scmp.eq.s32.totalorder %s20, 1
      %p120 = por %p118, %p119
      %p121 = scmp.ne.s32.totalorder %s110, %s111
      %p122 = scmp.eq.s32.totalorder %s20, 0
      %p123 = por %p121, %p122
      %p124 = scmp.ne.s32.totalorder %s110, %s111
      %p125 = scmp.eq.s32.totalorder %s21, 1
      %p126 = por %p124, %p125
      %p128 = scmp.ne.s32.totalorder %s111, %s127
      %p129 = scmp.eq.s32.totalorder %s21, 0
      %p130 = por %p128, %p129
      %p131 = scmp.le.s32.totalorder 1, %s15
      %p132 = scmp.lt.s32.totalorder %s15, 3
      %p133 = pnand %p131, %p132
      %p134 = pneg %p133
      // Predicated region
      $region9: #{tpu_custom_call.1} parent=5 // pred_check
        _
      $region10: #{tpu_custom_call.1} parent=5 // pred_check_branch
        %136 = sbr.rel (%p133) target = $region12
      $region11: #{tpu_custom_call.1} parent=5 // pred_region
        %s137 = ssub.s32 %s15, 1
        // Predicated region
        $region13: #{tpu_custom_call.1} parent=11 // pred_check
          %p138 = pneg %p76
        $region14: #{tpu_custom_call.1} parent=11 // pred_check_branch
          %140 = sbr.rel (%p138) target = $region16
        $region15: #{tpu_custom_call.1} parent=11 // pred_region
          _
        $region16: #{tpu_custom_call.1} parent=11 // pred_fallthru
          _
        // Predicated region
        $region17: #{tpu_custom_call.1} parent=11 // pred_check
          %p141 = pneg %p97
        $region18: #{tpu_custom_call.1} parent=11 // pred_check_branch
          %143 = sbr.rel (%p141) target = $region20
        $region19: #{tpu_custom_call.1} parent=11 // pred_region
          _
        $region20: #{tpu_custom_call.1} parent=11 // pred_fallthru
          _
      $region12: #{tpu_custom_call.1} parent=5 // pred_fallthru
        _
      %p144 = scmp.lt.s32.totalorder %s15, 2
      // Predicated region
      $region21: #{tpu_custom_call.1} parent=5 // pred_check
        %p145 = pneg %p144
      $region22: #{tpu_custom_call.1} parent=5 // pred_check_branch
        %147 = sbr.rel (%p145) target = $region24
      $region23: #{tpu_custom_call.1} parent=5 // pred_region
        // Predicated region
        $region25: #{tpu_custom_call.1} parent=23 // pred_check
          %p148 = pneg %p49
        $region26: #{tpu_custom_call.1} parent=23 // pred_check_branch
          %150 = sbr.rel (%p148) target = $region28
        $region27: #{tpu_custom_call.1} parent=23 // pred_region
          %s151 = sand.u32 %s39, 1
          %s152 = scalar_lea.sflag [#allocation4], %s151
          %s153 = sand.u32 %s39, 1
          %s154 = smul.addr %s153, 64
          %s155 = scalar_lea.vmem [#allocation3], %s154
          %s156 = smul.u32 2, %s23
          %158 = vsyncadd %s152, 0
          %s159 = smul.addr %s22, 8
          %s160 = sadd.s32 %s156, %s159
          %s161 = smul.addr %s160, 8
          %s162 = scalar_lea.hbm %s0, %s161
          %s163 = sshll.u32 %s162, 4
          %s164 = int_to_ptr.hbm [resolvable:$true] %s163
          %s165 = sshll.u32 %s155, 4
          %s166 = int_to_ptr.vmem [resolvable:$true] %s165
          %171 = dma.hbm_to_vmem [thread:$0]  %s164, 1024, %s166, %s152, 256, 256, 16
        $region28: #{tpu_custom_call.1} parent=23 // pred_fallthru
          _
      $region24: #{tpu_custom_call.1} parent=5 // pred_fallthru
        _
      %p172 = scmp.le.s32.totalorder 1, %s15
      %p173 = scmp.lt.s32.totalorder %s15, 3
      %p174 = pnand %p172, %p173
      %p175 = pneg %p174
      // Predicated region
      $region29: #{tpu_custom_call.1} parent=5 // pred_check
        _
      $region30: #{tpu_custom_call.1} parent=5 // pred_check_branch
        %177 = sbr.rel (%p174) target = $region32
      $region31: #{tpu_custom_call.1} parent=5 // pred_region
        %s178 = ssub.s32 %s15, 1
        %s179 = sand.u32 %s42, 1
        %s180 = scalar_lea.sflag [#allocation4], %s179
        %s181 = sand.u32 %s42, 1
        %s182 = smul.addr %s181, 64
        %s183 = scalar_lea.vmem [#allocation3], %s182
        // Predicated region
        $region33: #{tpu_custom_call.1} parent=31 // pred_check
          %p184 = pneg %p55
        $region34: #{tpu_custom_call.1} parent=31 // pred_check_branch
          %186 = sbr.rel (%p184) target = $region36
        $region35: #{tpu_custom_call.1} parent=31 // pred_region
          %188 = dma.done %s180, 1024
        $region36: #{tpu_custom_call.1} parent=31 // pred_fallthru
          _
        %s189 = sand.u32 %s42, 1
        %s190 = scalar_lea.sflag [#allocation4], %s189
        %s191 = sand.u32 %s42, 1
        %s192 = smul.addr %s191, 64
        %s193 = scalar_lea.vmem [#allocation3], %s192
        %p194 = pneg %p55
        %p195 = pneg %p52
        %p196 = pneg %p76
        %p197 = pneg %p73
        %p198 = pneg %p97
        %p199 = pneg %p94
        %p200 = pneg %p123
        %p201 = pneg %p120
        %s202 = sand.u32 %s110, 1
        %s203 = scalar_lea.sflag [#allocation5], %s202
        %s204 = sand.u32 %s110, 1
        %s205 = scalar_lea.vmem [#allocation6], %s204
        %s206 = smul.u32 2, %s25
        %p207 = scmp.eq.s32.totalorder %s25, 0
        // Predicated region
        $region37: #{tpu_custom_call.1} parent=31 // pred_check
          %p208 = pneg %p207
        $region38: #{tpu_custom_call.1} parent=31 // pred_check_branch
          %210 = sbr.rel (%p208) target = $region40
        $region39: #{tpu_custom_call.1} parent=31 // pred_region
          %vm211 = vcmask 253952
          %212 = vst.msk [vmem:[#allocation2] sm:$0x1] %vm211, 0.0
          %213 = vst.msk [vmem:[#allocation2 + $0x1] sm:$0x1] %vm211, -inf
        $region40: #{tpu_custom_call.1} parent=31 // pred_fallthru
          _
        %v214 = vld [vmem:[%s183] sm:$0xff]
        %v215 = vld [vmem:[%s183 + $0x8] sm:$0xff]
        %v216 = vld [vmem:[%s183 + $0x10] sm:$0xff]
        %v217 = vld [vmem:[%s183 + $0x18] sm:$0xff]
        %v218 = vld [vmem:[%s183 + $0x20] sm:$0xff]
        %v219 = vld [vmem:[%s183 + $0x28] sm:$0xff]
        %v220 = vld [vmem:[%s183 + $0x30] sm:$0xff]
        %v221 = vld [vmem:[%s183 + $0x38] sm:$0xff]
        %v222 = vld [vmem:[#allocation2] sm:$0x1]
        %v223 = vadd.f32 %v214, %v215
        %224 = vadd.xlane.f32.xlu0 %v223
        %v225 = vpop.xlane.xlu0 %224
        %v226 = vadd.f32 %v216, %v217
        %227 = vadd.xlane.f32.xlu0 %v226
        %v228 = vpop.xlane.xlu0 %227
        %v229 = vadd.f32 %v218, %v219
        %230 = vadd.xlane.f32.xlu0 %v229
        %v231 = vpop.xlane.xlu0 %230
        %v232 = vadd.f32 %v220, %v221
        %233 = vadd.xlane.f32.xlu0 %v232
        %v234 = vpop.xlane.xlu0 %233
        %v239 = vlaneseq
        %v240 = vand.u32 %v239, 127
        %v241 = vperm.slane %v225, %v240
        %v242 = vadd.s32 %v240, 4294967288
        %v243 = vperm.slane %v228, %v242
        %vm244 = vcmask 130112
        %v245 = vsel %vm244, %v243, %v241
        %v246 = vadd.s32 %v240, 4294967280
        %v247 = vperm.slane %v231, %v246
        %vm248 = vcmask 195712
        %v249 = vsel %vm248, %v247, %v245
        %v250 = vadd.s32 %v240, 4294967272
        %v251 = vperm.slane %v234, %v250
        %vm252 = vcmask 261312
        %v253 = vsel %vm252, %v251, %v249
        %v255 = vadd.f32 %v222, %v253
        %vm256 = vcmask 253952
        %257 = vst.msk [vmem:[#allocation2] sm:$0x1] %vm256, %v255
        %v258 = vld [vmem:[#allocation2 + $0x1] sm:$0x1]
        %v259 = vmax.f32 %v214, %v215
        %260 = vmax.xlane.f32.xlu0 %v259
        %v261 = vpop.xlane.xlu0 %260
        %v262 = vmax.f32 %v216, %v217
        %263 = vmax.xlane.f32.xlu0 %v262
        %v264 = vpop.xlane.xlu0 %263
        %v265 = vmax.f32 %v218, %v219
        %266 = vmax.xlane.f32.xlu0 %v265
        %v267 = vpop.xlane.xlu0 %266
        %v268 = vmax.f32 %v220, %v221
        %269 = vmax.xlane.f32.xlu0 %v268
        %v270 = vpop.xlane.xlu0 %269
        %v275 = vperm.slane %v261, %v240
        %v276 = vperm.slane %v264, %v242
        %v277 = vsel %vm244, %v276, %v275
        %v278 = vperm.slane %v267, %v246
        %v279 = vsel %vm248, %v278, %v277
        %v280 = vperm.slane %v270, %v250
        %v281 = vsel %vm252, %v280, %v279
        %v283 = vmax.f32 %v258, %v281
        %284 = vst.msk [vmem:[#allocation2 + $0x1] sm:$0x1] %vm256, %v283
        // Predicated region
        $region41: #{tpu_custom_call.1} parent=31 // pred_check
          %p285 = pneg %p207
        $region42: #{tpu_custom_call.1} parent=31 // pred_check_branch
          %287 = sbr.rel (%p285) target = $region44
        $region43: #{tpu_custom_call.1} parent=31 // pred_region
          %v288 = vld [vmem:[#allocation2] sm:$0x1]
          %v289 = vmul.f32 %v288, 0.00390625
          %290 = vst.msk [vmem:[#allocation2] sm:$0x1] %vm256, %v289
          %v291 = vld [vmem:[#allocation2] sm:$0x3]
          %v292 = vld [vmem:[%s1] sm:$0xff]
          %v293 = vld [vmem:[%s1 + $0x8] sm:$0xff]
          %v294 = vld [vmem:[%s1 + $0x10] sm:$0xff]
          %v295 = vld [vmem:[%s1 + $0x18] sm:$0xff]
          %vm296 = vcmask 261120
          %v298 = vsel %vm296, %v291, 0
          %300 = vmatpush.msra.mxu0 0.0
          %301 = vmatpush.msra.mxu0 0.0
          %302 = vmatpush.msra.mxu0 0.0
          %303 = vmatpush.msra.mxu0 0.0
          %304 = vmatpush.msra.mxu0 0.0
          %305 = vmatpush.msra.mxu0 0.0
          %306 = vmatpush.msra.mxu0 0.0
          %307 = vmatpush.msra.mxu0 0.0
          %308 = vmatpush.msra.mxu0 0.0
          %309 = vmatpush.msra.mxu0 0.0
          %310 = vmatpush.msra.mxu0 0.0
          %311 = vmatpush.msra.mxu0 0.0
          %312 = vmatpush.msra.mxu0 %v295
          %313 = vmatpush.msra.mxu0 %v294
          %314 = vmatpush.msra.mxu0 %v293
          %315 = vmatpush.msra.mxu0 %v292
          %316 = vmatmul.f32.gmra.mxu0 %v298
          %v317 = vpop.f32.mrf.mxu0
          %v318 = vadd.f32 0.0, %v317
          %319 = vdwg.mxu0
          %v320 = vmax.f32 %v318, 0.0
          %v322 = vrot.slane %v320, 1
          %v324 = vadd.f32 %v320, %v322
          %v325 = vld [vmem:[%s2] sm:$0x3]
          %vm326 = vcmask 15360
          %v328 = vsel %vm326, %v324, 0
          %vm330 = vcmask 1041408
          %v332 = vsel %vm330, %v325, 0
          %334 = vmatpush.msra.mxu0 0.0
          %335 = vmatpush.msra.mxu0 0.0
          %336 = vmatpush.msra.mxu0 0.0
          %337 = vmatpush.msra.mxu0 0.0
          %338 = vmatpush.msra.mxu0 0.0
          %339 = vmatpush.msra.mxu0 0.0
          %340 = vmatpush.msra.mxu0 0.0
          %341 = vmatpush.msra.mxu0 0.0
          %342 = vmatpush.msra.mxu0 0.0
          %343 = vmatpush.msra.mxu0 0.0
          %344 = vmatpush.msra.mxu0 0.0
          %345 = vmatpush.msra.mxu0 0.0
          %346 = vmatpush.msra.mxu0 0.0
          %347 = vmatpush.msra.mxu0 0.0
          %348 = vmatpush.msra.mxu0 0.0
          %349 = vmatpush.msra.mxu0 %v332
          %350 = vmatmul.f32.gmra.mxu0 %v328
          %v351 = vpop.f32.mrf.mxu0
          %v352 = vadd.f32 0.0, %v351
          %353 = vdwg.mxu0
          %v354 = vsub.f32 0.0, %v352
          %v355 = vmul.f32 %v354, 1.442695
          %v356 = vpow.pop %v355
          %v357 = vadd.f32 %v356, 1.0
          %v358 = vrcp.pop %v357
          %359 = vst.msk [vmem:[%s205] sm:$0x1] %vm256, %v358
        $region44: #{tpu_custom_call.1} parent=31 // pred_fallthru
          _
        %s360 = sand.u32 %s110, 1
        %s361 = scalar_lea.sflag [#allocation5], %s360
        %s362 = sand.u32 %s110, 1
        %s363 = scalar_lea.vmem [#allocation6], %s362
        // Predicated region
        $region45: #{tpu_custom_call.1} parent=31 // pred_check
          %p364 = pneg %p120
        $region46: #{tpu_custom_call.1} parent=31 // pred_check_branch
          %366 = sbr.rel (%p364) target = $region48
        $region47: #{tpu_custom_call.1} parent=31 // pred_region
          %368 = vsyncadd %s361, 0
          %s369 = scalar_lea.hbm %s3, %s24
          %s371 = sshll.u32 %s363, 4
          %s372 = int_to_ptr.vmem [resolvable:$true] %s371
          %s373 = sshll.u32 %s369, 4
          %s374 = int_to_ptr.hbm [resolvable:$true] %s373
          %376 = dma.vmem_to_hbm [thread:$0]  %s372, 16, %s374, %s361
        $region48: #{tpu_custom_call.1} parent=31 // pred_fallthru
          _
      $region32: #{tpu_custom_call.1} parent=5 // pred_fallthru
        _
      %p377 = scmp.le.s32.totalorder 2, %s15
      // Predicated region
      $region49: #{tpu_custom_call.1} parent=5 // pred_check
        %p378 = pneg %p377
      $region50: #{tpu_custom_call.1} parent=5 // pred_check_branch
        %380 = sbr.rel (%p378) target = $region52
      $region51: #{tpu_custom_call.1} parent=5 // pred_region
        %s381 = ssub.s32 %s15, 2
        // Predicated region
        $region53: #{tpu_custom_call.1} parent=51 // pred_check
          %p382 = pneg %p126
        $region54: #{tpu_custom_call.1} parent=51 // pred_check_branch
          %384 = sbr.rel (%p382) target = $region56
        $region55: #{tpu_custom_call.1} parent=51 // pred_region
          %s385 = sand.u32 %s111, 1
          %s386 = scalar_lea.sflag [#allocation5], %s385
          %s387 = sand.u32 %s111, 1
          %s388 = scalar_lea.vmem [#allocation6], %s387
          %390 = dma.done %s386, 16
        $region56: #{tpu_custom_call.1} parent=51 // pred_fallthru
          _
      $region52: #{tpu_custom_call.1} parent=5 // pred_fallthru
        _
    $region6: #{tpu_custom_call.1} parent=1 // loop_footer
      %s19 = sadd.s32 1, %s15
    $region7: #{tpu_custom_call.1} parent=1 // loop_footer_branch
      %14 = sbr.rel target = $region3
    $region8: #{tpu_custom_call.1} parent=1 // loop_exit
      _
    %391 = vsyncpa [#allocation4], 1
    %s392 = scalar_lea.sflag [#allocation4], 1
    %393 = vsyncpa %s392, 1
    %394 = vsyncpa [#allocation5], 1
    %s395 = scalar_lea.sflag [#allocation5], 1
    %396 = vsyncpa %s395, 1

</llo_original>
